<compile_context>
chip_gen: v7x
topology: tpu7x:2x2x1
jax: 0.10.0
libtpu: 0.0.40
codegen_flags: <defaults>
</compile_context>

<pallas_src>
import jax
import jax.numpy as jnp
from jax.experimental import pallas as pl
from jax.experimental.pallas import tpu as pltpu

# Hyperparameters implied by ReversalClassifier.__init__ -> STL(...)
TOKEN_EMBEDDING_SIZE = 256                      # num_units
NUM_HEADS = 8
REF_ENC_GRU_SIZE = 128                          # query_dim (d_q) => input feature size of x
HEAD_DIM = TOKEN_EMBEDDING_SIZE // NUM_HEADS    # 32 == key_dim (d_k) of the MHA

_HI = jax.lax.Precision.HIGHEST


def _round_up(a, b):
    return (a + b - 1) // b * b


def stl_attention_kernel(x_ref, a_ref, rhs_ref, out_ref):
    """Fused STL MHA forward for one batch tile: two MXU matmuls + segmented softmax."""
    # x arrives f32; cast to bf16 in-kernel (VPU has slack; avoids a wrapper-side HBM pass).
    x_bf = x_ref[...].astype(jnp.bfloat16)
    # (1) scores for all 8 heads in one MXU pass (scale pre-folded into A).
    scores = jnp.dot(x_bf, a_ref[...], preferred_element_type=jnp.float32)      # [tn, H*Tp] f32
    # (2) one row-max over all heads (softmax is shift-invariant per row; pad lanes are
    #     excluded from numerator/denominator by zero rows in RHS).
    m = jnp.max(scores, axis=-1, keepdims=True)
    p = jnp.exp(scores - m).astype(jnp.bfloat16)                                 # single bf16 cast
    # (3) ONE fused matmul against [Vbd | B']: numerator (lanes :256, heads concatenated) and
    #     per-head denominator broadcast over that head's 32 lanes (lanes 256:).
    res = jnp.dot(p, rhs_ref[...], preferred_element_type=jnp.float32)           # [tn, 512] f32
    num = res[:, :TOKEN_EMBEDDING_SIZE]
    den = res[:, TOKEN_EMBEDDING_SIZE:]
    out_ref[...] = (num * pl.reciprocal(den, approx=True)).astype(out_ref.dtype)


def precompute_constants(params):
    """Fold all batch-independent STL work into two kernel constants (call once per params)."""
    embed = params["embed"].astype(jnp.float32)                          # [T, 32]
    t = embed.shape[0]
    tp = _round_up(t, 16)                                                # H*Tp multiple of 128
    htp = NUM_HEADS * tp

    keys = jnp.tanh(embed)                                               # [T, 32]
    k = jnp.dot(keys, params["w_key"].T, precision=_HI)                  # [T, 256]
    v = jnp.dot(keys, params["w_value"].T, precision=_HI)                # [T, 256]
    wq = params["w_query"].astype(jnp.float32)                           # [256, 128]
    scale = 1.0 / jnp.sqrt(jnp.float32(HEAD_DIM))                        # torch: / key_dim**0.5

    a = jnp.zeros((REF_ENC_GRU_SIZE, htp), jnp.float32)
    rhs = jnp.zeros((htp, 2 * TOKEN_EMBEDDING_SIZE), jnp.float32)        # [Vbd | B']
    for h in range(NUM_HEADS):
        lo = h * HEAD_DIM
        a_h = jnp.dot(wq[lo:lo + HEAD_DIM, :].T, k[:, lo:lo + HEAD_DIM].T,
                      precision=_HI) * scale                             # [128, T]
        a = a.at[:, h * tp:h * tp + t].set(a_h)
        # Numerator block: this head's valid rows of V in its 32 output lanes (fused head concat).
        rhs = rhs.at[h * tp:h * tp + t, lo:lo + HEAD_DIM].set(v[:, lo:lo + HEAD_DIM])
        # Denominator block: ones mapping this head's valid rows onto its 32 output lanes.
        rhs = rhs.at[h * tp:h * tp + t,
                     TOKEN_EMBEDDING_SIZE + lo:TOKEN_EMBEDDING_SIZE + lo + HEAD_DIM].set(1.0)

    return {"a": a.astype(jnp.bfloat16), "rhs": rhs.astype(jnp.bfloat16)}


def reversal_classifier_forward(x, consts, *, tile_n=1024, out_dtype=jnp.bfloat16):
    """Forward of ReversalClassifier (GradientReversalFunction.forward is identity).

    # TODO(synk): custom_vjp for the clamped & negated reversed gradient (backward-only
    # behaviour of GradientReversalFunction) is not implemented (forward-only kernel).
    """
    n = x.shape[0]
    htp = consts["a"].shape[1]

    # Tile: multiple of 16 (bf16 sublane packing), capped at tile_n, sized so the parallel grid
    # axis has >=2 steps when the batch allows (shards across v7x's two TensorCores).
    tn = max(16, min(tile_n, _round_up(max(1, (n + 1) // 2), 16)))
    n_pad = _round_up(n, tn)
    x32 = x.astype(jnp.float32)          # no-op for f32 inputs; bf16 cast happens in-kernel
    if n_pad != n:
        x32 = jnp.pad(x32, ((0, n_pad - n), (0, 0)))

    out_bytes = jnp.dtype(out_dtype).itemsize
    cost = pl.CostEstimate(
        flops=2 * n_pad * REF_ENC_GRU_SIZE * htp
              + 2 * n_pad * htp * 2 * TOKEN_EMBEDDING_SIZE,
        transcendentals=n_pad * htp,
        bytes_accessed=n_pad * (REF_ENC_GRU_SIZE * 4 + TOKEN_EMBEDDING_SIZE * out_bytes),
    )

    out = pl.pallas_call(
        stl_attention_kernel,
        out_shape=jax.ShapeDtypeStruct((n_pad, TOKEN_EMBEDDING_SIZE), out_dtype),
        grid=(n_pad // tn,),
        in_specs=[
            pl.BlockSpec((tn, REF_ENC_GRU_SIZE), lambda i: (i, 0)),               # x tile (f32)
            pl.BlockSpec((REF_ENC_GRU_SIZE, htp), lambda i: (0, 0)),              # A (pinned)
            pl.BlockSpec((htp, 2 * TOKEN_EMBEDDING_SIZE), lambda i: (0, 0)),      # [Vbd|B'] (pinned)
        ],
        out_specs=pl.BlockSpec((tn, TOKEN_EMBEDDING_SIZE), lambda i: (i, 0)),
        compiler_params=pltpu.CompilerParams(dimension_semantics=("parallel",)),
        cost_estimate=cost,
    )(x32, consts["a"], consts["rhs"])

    # Match torch output layout: [N, T_q=1, token_embedding_size]
    return out[:n, None, :]


def reference_forward(x, params):
    """Pure-JAX reference mirroring the PyTorch STL/MultiHeadAttention forward."""
    n = x.shape[0]
    keys = jnp.tanh(params["embed"])                     # [T, 32]
    q = jnp.dot(x, params["w_query"].T, precision=_HI)   # [N, 256]
    k = jnp.dot(keys, params["w_key"].T, precision=_HI)  # [T, 256]
    v = jnp.dot(keys, params["w_value"].T, precision=_HI)
    qh = q.reshape(n, NUM_HEADS, HEAD_DIM)
    kh = k.reshape(-1, NUM_HEADS, HEAD_DIM)
    vh = v.reshape(-1, NUM_HEADS, HEAD_DIM)
    s = jnp.einsum("nhd,thd->nht", qh, kh, precision=_HI) / jnp.sqrt(jnp.float32(HEAD_DIM))
    p = jax.nn.softmax(s, axis=-1)
    o = jnp.einsum("nht,thd->nhd", p, vh, precision=_HI).reshape(n, TOKEN_EMBEDDING_SIZE)
    return o[:, None, :]


def init_params(key, token_num):
    """Deterministic parameter init (shapes from STL / MultiHeadAttention __init__)."""
    k_embed, k_q, k_k, k_v = jax.random.split(key, 4)
    # nn.Parameter(token_num, token_embedding_size // num_heads), init.normal_(std=0.5)
    embed = 0.5 * jax.random.normal(k_embed, (token_num, HEAD_DIM), jnp.float32)
    # nn.Linear(query_dim=128 -> 256, bias=False): weight [out, in], U(-1/sqrt(in), 1/sqrt(in))
    bq = 1.0 / jnp.sqrt(jnp.float32(REF_ENC_GRU_SIZE))
    w_query = jax.random.uniform(k_q, (TOKEN_EMBEDDING_SIZE, REF_ENC_GRU_SIZE),
                                 jnp.float32, -bq, bq)
    bk = 1.0 / jnp.sqrt(jnp.float32(HEAD_DIM))
    w_key = jax.random.uniform(k_k, (TOKEN_EMBEDDING_SIZE, HEAD_DIM), jnp.float32, -bk, bk)
    w_value = jax.random.uniform(k_v, (TOKEN_EMBEDDING_SIZE, HEAD_DIM), jnp.float32, -bk, bk)
    return {"embed": embed, "w_query": w_query, "w_key": w_key, "w_value": w_value}


if __name__ == "__main__":
    key = jax.random.PRNGKey(0)
    k_x, k_p = jax.random.split(key)

    batch = 4
    output_dim = 10  # number of speakers == token_num of STL
    # x must have feature size ref_enc_gru_size=128 (the MHA query_dim).
    x = jax.random.normal(k_x, (batch, REF_ENC_GRU_SIZE), jnp.float32)
    params = init_params(k_p, output_dim)

    consts = precompute_constants(params)            # params-only; done once, reused every call
    out = reversal_classifier_forward(x, consts)
    out = jax.block_until_ready(out)

    ref = reference_forward(x, params)
    assert out.shape == (batch, 1, TOKEN_EMBEDDING_SIZE), out.shape
    assert jnp.allclose(out.astype(jnp.float32), ref, atol=4e-2, rtol=4e-2), \
        float(jnp.max(jnp.abs(out.astype(jnp.float32) - ref)))

    print("KERNEL_OK")
</pallas_src>

<mosaic_0001>
module attributes {stable_mosaic.version = 11 : i64} {
  func.func @stl_attention_kernel(%arg0: i32, %arg1: memref<16x128xf32, #tpu.memory_space<vmem>>, %arg2: memref<128x128xbf16, #tpu.memory_space<vmem>>, %arg3: memref<128x512xbf16, #tpu.memory_space<vmem>>, %arg4: memref<16x256xbf16, #tpu.memory_space<vmem>>) attributes {dimension_semantics = [#tpu.dimension_semantics<parallel>], iteration_bounds = array<i64: 1>, scalar_prefetch = 0 : i64, scratch_operands = 0 : i64, tpu.core_type = #tpu.core_type<tc>, window_params = [{transform_indices = @transform_0, window_bounds = array<i64: 16, 128>}, {pipeline_mode = #tpu.pipeline_mode<synchronous>, transform_indices = @transform_1, window_bounds = array<i64: 128, 128>}, {pipeline_mode = #tpu.pipeline_mode<synchronous>, transform_indices = @transform_2, window_bounds = array<i64: 128, 512>}, {transform_indices = @transform_3, window_bounds = array<i64: 16, 256>}]} {
    %c0 = arith.constant 0 : index
    %c0_0 = arith.constant 0 : index
    %0 = vector.load %arg1[%c0, %c0_0] : memref<16x128xf32, #tpu.memory_space<vmem>>, vector<16x128xf32>
    %1 = arith.truncf %0 : vector<16x128xf32> to vector<16x128xbf16>
    %c0_1 = arith.constant 0 : index
    %c0_2 = arith.constant 0 : index
    %2 = vector.load %arg2[%c0_1, %c0_2] : memref<128x128xbf16, #tpu.memory_space<vmem>>, vector<128x128xbf16>
    %cst = arith.constant dense<0.000000e+00> : vector<16x128xf32>
    %3 = tpu.matmul %1, %2, %cst {dimension_numbers = #tpu.dot_dimension_numbers<[1], [0], [0], [1], [0, 0, 1, 1], [], []>} : vector<16x128xbf16>, vector<128x128xbf16>, vector<16x128xf32> -> vector<16x128xf32>
    %cst_3 = arith.constant dense<0xFF800000> : vector<16xf32>
    %4 = vector.multi_reduction <maximumf>, %3, %cst_3 [1] : vector<16x128xf32> to vector<16xf32>
    %5 = vector.shape_cast %4 : vector<16xf32> to vector<16x1xf32>
    %6 = vector.broadcast %5 : vector<16x1xf32> to vector<16x128xf32>
    %7 = arith.subf %3, %6 : vector<16x128xf32>
    %8 = math.exp %7 : vector<16x128xf32>
    %9 = arith.truncf %8 : vector<16x128xf32> to vector<16x128xbf16>
    %c0_4 = arith.constant 0 : index
    %c0_5 = arith.constant 0 : index
    %10 = vector.load %arg3[%c0_4, %c0_5] : memref<128x512xbf16, #tpu.memory_space<vmem>>, vector<128x512xbf16>
    %cst_6 = arith.constant dense<0.000000e+00> : vector<16x512xf32>
    %11 = tpu.matmul %9, %10, %cst_6 {dimension_numbers = #tpu.dot_dimension_numbers<[1], [0], [0], [1], [0, 0, 1, 1], [], []>} : vector<16x128xbf16>, vector<128x512xbf16>, vector<16x512xf32> -> vector<16x512xf32>
    %12 = vector.extract_strided_slice %11 {offsets = [0, 0], sizes = [16, 256], strides = [1, 1]} : vector<16x512xf32> to vector<16x256xf32>
    %13 = vector.extract_strided_slice %11 {offsets = [0, 256], sizes = [16, 256], strides = [1, 1]} : vector<16x512xf32> to vector<16x256xf32>
    %14 = tpu.reciprocal %13 {approx = true} : vector<16x256xf32> -> vector<16x256xf32>
    %15 = arith.mulf %12, %14 : vector<16x256xf32>
    %16 = arith.truncf %15 : vector<16x256xf32> to vector<16x256xbf16>
    %c0_7 = arith.constant 0 : index
    %c0_8 = arith.constant 0 : index
    %17 = vector.load %arg4[%c0_7, %c0_8] : memref<16x256xbf16, #tpu.memory_space<vmem>>, vector<16x256xbf16>
    tpu.vector_store %arg4[%c0_7, %c0_8], %16 {strides = array<i32>} : memref<16x256xbf16, #tpu.memory_space<vmem>>, vector<16x256xbf16>,
    return
  }
  func.func @transform_0(%arg0: i32) -> (i32, i32) {
    %c0_i32 = arith.constant 0 : i32
    %c0_i32_0 = arith.constant 0 : i32
    return %arg0, %c0_i32 : i32, i32
  }
  func.func @transform_1(%arg0: i32) -> (i32, i32) {
    %c0_i32 = arith.constant 0 : i32
    %c0_i32_0 = arith.constant 0 : i32
    %c0_i32_1 = arith.constant 0 : i32
    return %c0_i32, %c0_i32_0 : i32, i32
  }
  func.func @transform_2(%arg0: i32) -> (i32, i32) {
    %c0_i32 = arith.constant 0 : i32
    %c0_i32_0 = arith.constant 0 : i32
    %c0_i32_1 = arith.constant 0 : i32
    return %c0_i32, %c0_i32_0 : i32, i32
  }
  func.func @transform_3(%arg0: i32) -> (i32, i32) {
    %c0_i32 = arith.constant 0 : i32
    %c0_i32_0 = arith.constant 0 : i32
    return %arg0, %c0_i32 : i32, i32
  }
}

</mosaic_0001>

<llo_original>
// kernel: tpu_custom_call.1
$region0: #{tpu_custom_call.1}
  #allocation0 [shape = 'u32[]', space=smem, size = 0x4, offset = 0x4, fixed_abs, tag = 'smem constant byte address 0x4 - core index']
  #allocation1 [shape = 'u32[144,128]{1,0:T(1,128)}', space=vmem, size = 0x12000, scoped, tag = 'internal scratch']
  %s0 = inlined_call_operand.hbm [shape: f32[16,128], index: 0, kind: input, shape index: {}]
  %s1 = inlined_call_operand.hbm [shape: bf16[128,128], index: 1, kind: input, shape index: {}]
  %s2 = inlined_call_operand.hbm [shape: bf16[128,512], index: 2, kind: input, shape index: {}]
  %s3 = inlined_call_operand.hbm [shape: bf16[16,256], index: 3, kind: output, shape index: {}]
  %s4 = sld [smem:[#allocation0]]
  $region34: #{tpu_custom_call.1} parent=0
    _
  %s6 = ssub.s32 1, %s4
  %s7 = scalar_select 0, %s6, %s4
  $region1: #{tpu_custom_call.1} parent=0
    #allocation2 [shape = 'u8[8192]{0}', space=vmem, size = 0x2000, scoped, tag = 'input window, operand 0, single buffered']
    #allocation3 [shape = 's32[1]{0}', space=sflag, size = 0x4, scoped, tag = 'scoped memory for tpu_custom_call.1']
    #allocation4 [shape = 's32[1]{0}', space=sflag, size = 0x4, scoped, tag = 'scoped memory for tpu_custom_call.1']
    #allocation5 [shape = 'u8[32768]{0}', space=vmem, size = 0x8000, scoped, tag = 'input window, operand 1, single buffered']
    #allocation6 [shape = 's32[1]{0}', space=sflag, size = 0x4, scoped, tag = 'scoped memory for tpu_custom_call.1']
    #allocation7 [shape = 'u8[131072]{0}', space=vmem, size = 0x20000, scoped, tag = 'input window, operand 2, single buffered']
    #allocation8 [shape = 'u8[8192]{0}', space=vmem, size = 0x2000, scoped, tag = 'output window, operand 0, single buffered']
    %8 = vsyncpa [#allocation3], 0
    %9 = vsyncpa [#allocation6], 0
    %10 = vsyncpa [#allocation4], 0
    // Predicated region
    $region2: #{tpu_custom_call.1} parent=1 // pred_check
      _
    $region3: #{tpu_custom_call.1} parent=1 // pred_check_branch
      %12 = sbr.rel (0) target = $region5
    $region4: #{tpu_custom_call.1} parent=1 // pred_region
      %s14 = ssub.s32 256, 256
      %15 = vsyncadd [#allocation3], %s14
      %s16 = sshll.u32 [#allocation2], 4
      %s17 = int_to_ptr.vmem [resolvable:$true] %s16
      %22 = dma.hbm_to_vmem [thread:$0]  %s0, 256, %s17, [#allocation3], 128, 128, 8
    $region5: #{tpu_custom_call.1} parent=1 // pred_fallthru
      _
    // Predicated region
    $region6: #{tpu_custom_call.1} parent=1 // pred_check
      _
    $region7: #{tpu_custom_call.1} parent=1 // pred_check_branch
      %24 = sbr.rel (0) target = $region9
    $region8: #{tpu_custom_call.1} parent=1 // pred_region
      %s26 = ssub.s32 1024, 1024
      %27 = vsyncadd [#allocation6], %s26
      %s28 = sshll.u32 [#allocation5], 4
      %s29 = int_to_ptr.vmem [resolvable:$true] %s28
      %34 = dma.hbm_to_vmem [thread:$0]  %s1, 1024, %s29, [#allocation6], 64, 64, 4
    $region9: #{tpu_custom_call.1} parent=1 // pred_fallthru
      _
    // Predicated region
    $region10: #{tpu_custom_call.1} parent=1 // pred_check
      _
    $region11: #{tpu_custom_call.1} parent=1 // pred_check_branch
      %36 = sbr.rel (0) target = $region13
    $region12: #{tpu_custom_call.1} parent=1 // pred_region
      %s38 = ssub.s32 4096, 4096
      %39 = vsyncadd [#allocation6], %s38
      %s40 = sshll.u32 [#allocation7], 4
      %s41 = int_to_ptr.vmem [resolvable:$true] %s40
      %46 = dma.hbm_to_vmem [thread:$0]  %s2, 4096, %s41, [#allocation6], 256, 256, 16
    $region13: #{tpu_custom_call.1} parent=1 // pred_fallthru
      _
    // Predicated region
    $region14: #{tpu_custom_call.1} parent=1 // pred_check
      _
    $region15: #{tpu_custom_call.1} parent=1 // pred_check_branch
      %48 = sbr.rel (0) target = $region17
    $region16: #{tpu_custom_call.1} parent=1 // pred_region
      %49 = dma.done [#allocation3], 256
    $region17: #{tpu_custom_call.1} parent=1 // pred_fallthru
      _
    // Predicated region
    $region18: #{tpu_custom_call.1} parent=1 // pred_check
      _
    $region19: #{tpu_custom_call.1} parent=1 // pred_check_branch
      %51 = sbr.rel (0) target = $region21
    $region20: #{tpu_custom_call.1} parent=1 // pred_region
      %52 = dma.done [#allocation6], 1024
    $region21: #{tpu_custom_call.1} parent=1 // pred_fallthru
      _
    // Predicated region
    $region22: #{tpu_custom_call.1} parent=1 // pred_check
      _
    $region23: #{tpu_custom_call.1} parent=1 // pred_check_branch
      %54 = sbr.rel (0) target = $region25
    $region24: #{tpu_custom_call.1} parent=1 // pred_region
      %55 = dma.done [#allocation6], 4096
    $region25: #{tpu_custom_call.1} parent=1 // pred_fallthru
      _
    %v57 = vld [vmem:[#allocation2] sm:$0xff]
    %v58 = vld [vmem:[#allocation2 + $0x8] sm:$0xff]
    %v59 = vpack.c.bf16 %v58, %v57
    %v60 = vld [vmem:[#allocation5] sm:$0xf]
    %v61 = vld [vmem:[#allocation5 + $0x4] sm:$0xf]
    %v62 = vld [vmem:[#allocation5 + $0x8] sm:$0xf]
    %v63 = vld [vmem:[#allocation5 + $0xc] sm:$0xf]
    %v64 = vld [vmem:[#allocation5 + $0x10] sm:$0xf]
    %v65 = vld [vmem:[#allocation5 + $0x14] sm:$0xf]
    %v66 = vld [vmem:[#allocation5 + $0x18] sm:$0xf]
    %v67 = vld [vmem:[#allocation5 + $0x1c] sm:$0xf]
    %v68 = vld [vmem:[#allocation5 + $0x20] sm:$0xf]
    %v69 = vld [vmem:[#allocation5 + $0x24] sm:$0xf]
    %v70 = vld [vmem:[#allocation5 + $0x28] sm:$0xf]
    %v71 = vld [vmem:[#allocation5 + $0x2c] sm:$0xf]
    %v72 = vld [vmem:[#allocation5 + $0x30] sm:$0xf]
    %v73 = vld [vmem:[#allocation5 + $0x34] sm:$0xf]
    %v74 = vld [vmem:[#allocation5 + $0x38] sm:$0xf]
    %v75 = vld [vmem:[#allocation5 + $0x3c] sm:$0xf]
    %v92 = vunpack.c.l.b16 %v60
    %v93 = vunpack.c.l.b16 %v61
    %v94 = vunpack.c.l.b16 %v62
    %v95 = vunpack.c.l.b16 %v63
    %v96 = vunpack.c.l.b16 %v64
    %v97 = vunpack.c.l.b16 %v65
    %v98 = vunpack.c.l.b16 %v66
    %v99 = vunpack.c.l.b16 %v67
    %v100 = vunpack.c.l.b16 %v68
    %v101 = vunpack.c.l.b16 %v69
    %v102 = vunpack.c.l.b16 %v70
    %v103 = vunpack.c.l.b16 %v71
    %v104 = vunpack.c.l.b16 %v72
    %v105 = vunpack.c.l.b16 %v73
    %v106 = vunpack.c.l.b16 %v74
    %v107 = vunpack.c.l.b16 %v75
    %v108 = vpack.c.b16 %v93, %v92
    %v109 = vpack.c.b16 %v95, %v94
    %v110 = vpack.c.b16 %v97, %v96
    %v111 = vpack.c.b16 %v99, %v98
    %v112 = vpack.c.b16 %v101, %v100
    %v113 = vpack.c.b16 %v103, %v102
    %v114 = vpack.c.b16 %v105, %v104
    %v115 = vpack.c.b16 %v107, %v106
    %124 = vmatprep.subr.bf16.mxu0 0
    %125 = vmatpush1.bf16.msra.mxu0 %v108
    %126 = vmatprep.subr.bf16.mxu0 0
    %127 = vmatpush1.bf16.msra.mxu0 %v109
    %128 = vmatprep.subr.bf16.mxu0 0
    %129 = vmatpush1.bf16.msra.mxu0 %v110
    %130 = vmatprep.subr.bf16.mxu0 0
    %131 = vmatpush1.bf16.msra.mxu0 %v111
    %132 = vmatprep.subr.bf16.mxu0 0
    %133 = vmatpush1.bf16.msra.mxu0 %v112
    %134 = vmatprep.subr.bf16.mxu0 0
    %135 = vmatpush1.bf16.msra.mxu0 %v113
    %136 = vmatprep.subr.bf16.mxu0 0
    %137 = vmatpush1.bf16.msra.mxu0 %v114
    %138 = vmatprep.subr.bf16.mxu0 0
    %139 = vmatpush1.bf16.msra.mxu0 %v115
    %140 = vmatprep.subr.bf16.mxu0 0
    %141 = vmatpush1.bf16.msra.mxu0 0
    %142 = vmatprep.subr.bf16.mxu0 0
    %143 = vmatpush1.bf16.msra.mxu0 0
    %144 = vmatprep.subr.bf16.mxu0 0
    %145 = vmatpush1.bf16.msra.mxu0 0
    %146 = vmatprep.subr.bf16.mxu0 0
    %147 = vmatpush1.bf16.msra.mxu0 0
    %148 = vmatprep.subr.bf16.mxu0 0
    %149 = vmatpush1.bf16.msra.mxu0 0
    %150 = vmatprep.subr.bf16.mxu0 0
    %151 = vmatpush1.bf16.msra.mxu0 0
    %152 = vmatprep.subr.bf16.mxu0 0
    %153 = vmatpush1.bf16.msra.mxu0 0
    %154 = vmatprep.subr.bf16.mxu0 0
    %155 = vmatpush1.bf16.msra.mxu0 0
    %156 = vmatprep.mubr.bf16.mxu0 0
    %157 = vmatmul.mubr.bf16.gmra.mrb[0].mxu0 %v59
    %v158 = vpop.f32.mrb[0].mxu0
    %v159 = vadd.f32 0.0, %v158
    %v160 = vpop.f32.mrb[0].mxu0
    %v161 = vpop.f32.mrb[0].mxu0
    %v162 = vadd.f32 0.0, %v161
    %v163 = vpop.f32.mrb[0].mxu0
    %164 = vdwg.mxu0
    %165 = vmax.xlane.f32.xlu0 %v159
    %v166 = vpop.xlane.xlu0 %165
    %167 = vmax.xlane.f32.xlu0 %v162
    %v168 = vpop.xlane.xlu0 %167
    %v169 = vsub.f32 %v159, %v166
    %v170 = vsub.f32 %v162, %v168
    %v171 = vmul.f32 %v169, 1.442695
    %v172 = vpow.pop %v171
    %v173 = vmul.f32 %v170, 1.442695
    %v174 = vpow.pop %v173
    %v175 = vpack.c.bf16 %v174, %v172
    %v176 = vld [vmem:[#allocation7] sm:$0xff]
    %v177 = vld [vmem:[#allocation7 + $0x8] sm:$0xff]
    %v178 = vld [vmem:[#allocation7 + $0x10] sm:$0xff]
    %v179 = vld [vmem:[#allocation7 + $0x18] sm:$0xff]
    %v180 = vld [vmem:[#allocation7 + $0x20] sm:$0xff]
    %v181 = vld [vmem:[#allocation7 + $0x28] sm:$0xff]
    %v182 = vld [vmem:[#allocation7 + $0x30] sm:$0xff]
    %v183 = vld [vmem:[#allocation7 + $0x38] sm:$0xff]
    %v184 = vld [vmem:[#allocation7 + $0x40] sm:$0xff]
    %v185 = vld [vmem:[#allocation7 + $0x48] sm:$0xff]
    %v186 = vld [vmem:[#allocation7 + $0x50] sm:$0xff]
    %v187 = vld [vmem:[#allocation7 + $0x58] sm:$0xff]
    %v188 = vld [vmem:[#allocation7 + $0x60] sm:$0xff]
    %v189 = vld [vmem:[#allocation7 + $0x68] sm:$0xff]
    %v190 = vld [vmem:[#allocation7 + $0x70] sm:$0xff]
    %v191 = vld [vmem:[#allocation7 + $0x78] sm:$0xff]
    %v192 = vld [vmem:[#allocation7 + $0x80] sm:$0xff]
    %v193 = vld [vmem:[#allocation7 + $0x88] sm:$0xff]
    %v194 = vld [vmem:[#allocation7 + $0x90] sm:$0xff]
    %v195 = vld [vmem:[#allocation7 + $0x98] sm:$0xff]
    %v196 = vld [vmem:[#allocation7 + $0xa0] sm:$0xff]
    %v197 = vld [vmem:[#allocation7 + $0xa8] sm:$0xff]
    %v198 = vld [vmem:[#allocation7 + $0xb0] sm:$0xff]
    %v199 = vld [vmem:[#allocation7 + $0xb8] sm:$0xff]
    %v200 = vld [vmem:[#allocation7 + $0xc0] sm:$0xff]
    %v201 = vld [vmem:[#allocation7 + $0xc8] sm:$0xff]
    %v202 = vld [vmem:[#allocation7 + $0xd0] sm:$0xff]
    %v203 = vld [vmem:[#allocation7 + $0xd8] sm:$0xff]
    %v204 = vld [vmem:[#allocation7 + $0xe0] sm:$0xff]
    %v205 = vld [vmem:[#allocation7 + $0xe8] sm:$0xff]
    %v206 = vld [vmem:[#allocation7 + $0xf0] sm:$0xff]
    %v207 = vld [vmem:[#allocation7 + $0xf8] sm:$0xff]
    %v240 = vunpack.c.l.b16 %v176
    %v241 = vunpack.c.h.b16 %v176
    %v242 = vunpack.c.l.b16 %v177
    %v243 = vunpack.c.h.b16 %v177
    %v244 = vunpack.c.l.b16 %v178
    %v245 = vunpack.c.h.b16 %v178
    %v246 = vunpack.c.l.b16 %v179
    %v247 = vunpack.c.h.b16 %v179
    %v248 = vunpack.c.l.b16 %v180
    %v249 = vunpack.c.h.b16 %v180
    %v250 = vunpack.c.l.b16 %v181
    %v251 = vunpack.c.h.b16 %v181
    %v252 = vunpack.c.l.b16 %v182
    %v253 = vunpack.c.h.b16 %v182
    %v254 = vunpack.c.l.b16 %v183
    %v255 = vunpack.c.h.b16 %v183
    %v256 = vunpack.c.l.b16 %v184
    %v257 = vunpack.c.h.b16 %v184
    %v258 = vunpack.c.l.b16 %v185
    %v259 = vunpack.c.h.b16 %v185
    %v260 = vunpack.c.l.b16 %v186
    %v261 = vunpack.c.h.b16 %v186
    %v262 = vunpack.c.l.b16 %v187
    %v263 = vunpack.c.h.b16 %v187
    %v264 = vunpack.c.l.b16 %v188
    %v265 = vunpack.c.h.b16 %v188
    %v266 = vunpack.c.l.b16 %v189
    %v267 = vunpack.c.h.b16 %v189
    %v268 = vunpack.c.l.b16 %v190
    %v269 = vunpack.c.h.b16 %v190
    %v270 = vunpack.c.l.b16 %v191
    %v271 = vunpack.c.h.b16 %v191
    %v272 = vunpack.c.l.b16 %v192
    %v273 = vunpack.c.h.b16 %v192
    %v274 = vunpack.c.l.b16 %v193
    %v275 = vunpack.c.h.b16 %v193
    %v276 = vunpack.c.l.b16 %v194
    %v277 = vunpack.c.h.b16 %v194
    %v278 = vunpack.c.l.b16 %v195
    %v279 = vunpack.c.h.b16 %v195
    %v280 = vunpack.c.l.b16 %v196
    %v281 = vunpack.c.h.b16 %v196
    %v282 = vunpack.c.l.b16 %v197
    %v283 = vunpack.c.h.b16 %v197
    %v284 = vunpack.c.l.b16 %v198
    %v285 = vunpack.c.h.b16 %v198
    %v286 = vunpack.c.l.b16 %v199
    %v287 = vunpack.c.h.b16 %v199
    %v288 = vunpack.c.l.b16 %v200
    %v289 = vunpack.c.h.b16 %v200
    %v290 = vunpack.c.l.b16 %v201
    %v291 = vunpack.c.h.b16 %v201
    %v292 = vunpack.c.l.b16 %v202
    %v293 = vunpack.c.h.b16 %v202
    %v294 = vunpack.c.l.b16 %v203
    %v295 = vunpack.c.h.b16 %v203
    %v296 = vunpack.c.l.b16 %v204
    %v297 = vunpack.c.h.b16 %v204
    %v298 = vunpack.c.l.b16 %v205
    %v299 = vunpack.c.h.b16 %v205
    %v300 = vunpack.c.l.b16 %v206
    %v301 = vunpack.c.h.b16 %v206
    %v302 = vunpack.c.l.b16 %v207
    %v303 = vunpack.c.h.b16 %v207
    %v304 = vpack.c.b16 %v244, %v240
    %v305 = vpack.c.b16 %v245, %v241
    %v306 = vpack.c.b16 %v246, %v242
    %v307 = vpack.c.b16 %v247, %v243
    %v308 = vpack.c.b16 %v252, %v248
    %v309 = vpack.c.b16 %v253, %v249
    %v310 = vpack.c.b16 %v254, %v250
    %v311 = vpack.c.b16 %v255, %v251
    %v312 = vpack.c.b16 %v260, %v256
    %v313 = vpack.c.b16 %v261, %v257
    %v314 = vpack.c.b16 %v262, %v258
    %v315 = vpack.c.b16 %v263, %v259
    %v316 = vpack.c.b16 %v268, %v264
    %v317 = vpack.c.b16 %v269, %v265
    %v318 = vpack.c.b16 %v270, %v266
    %v319 = vpack.c.b16 %v271, %v267
    %v320 = vpack.c.b16 %v276, %v272
    %v321 = vpack.c.b16 %v277, %v273
    %v322 = vpack.c.b16 %v278, %v274
    %v323 = vpack.c.b16 %v279, %v275
    %v324 = vpack.c.b16 %v284, %v280
    %v325 = vpack.c.b16 %v285, %v281
    %v326 = vpack.c.b16 %v286, %v282
    %v327 = vpack.c.b16 %v287, %v283
    %v328 = vpack.c.b16 %v292, %v288
    %v329 = vpack.c.b16 %v293, %v289
    %v330 = vpack.c.b16 %v294, %v290
    %v331 = vpack.c.b16 %v295, %v291
    %v332 = vpack.c.b16 %v300, %v296
    %v333 = vpack.c.b16 %v301, %v297
    %v334 = vpack.c.b16 %v302, %v298
    %v335 = vpack.c.b16 %v303, %v299
    %368 = vmatprep.subr.bf16.mxu0 %v305
    %369 = vmatpush1.bf16.msra.mxu0 %v304
    %370 = vmatprep.subr.bf16.mxu0 %v309
    %371 = vmatpush1.bf16.msra.mxu0 %v308
    %372 = vmatprep.subr.bf16.mxu0 %v313
    %373 = vmatpush1.bf16.msra.mxu0 %v312
    %374 = vmatprep.subr.bf16.mxu0 %v317
    %375 = vmatpush1.bf16.msra.mxu0 %v316
    %376 = vmatprep.subr.bf16.mxu0 %v321
    %377 = vmatpush1.bf16.msra.mxu0 %v320
    %378 = vmatprep.subr.bf16.mxu0 %v325
    %379 = vmatpush1.bf16.msra.mxu0 %v324
    %380 = vmatprep.subr.bf16.mxu0 %v329
    %381 = vmatpush1.bf16.msra.mxu0 %v328
    %382 = vmatprep.subr.bf16.mxu0 %v333
    %383 = vmatpush1.bf16.msra.mxu0 %v332
    %384 = vmatprep.subr.bf16.mxu0 0
    %385 = vmatpush1.bf16.msra.mxu0 0
    %386 = vmatprep.subr.bf16.mxu0 0
    %387 = vmatpush1.bf16.msra.mxu0 0
    %388 = vmatprep.subr.bf16.mxu0 0
    %389 = vmatpush1.bf16.msra.mxu0 0
    %390 = vmatprep.subr.bf16.mxu0 0
    %391 = vmatpush1.bf16.msra.mxu0 0
    %392 = vmatprep.subr.bf16.mxu0 0
    %393 = vmatpush1.bf16.msra.mxu0 0
    %394 = vmatprep.subr.bf16.mxu0 0
    %395 = vmatpush1.bf16.msra.mxu0 0
    %396 = vmatprep.subr.bf16.mxu0 0
    %397 = vmatpush1.bf16.msra.mxu0 0
    %398 = vmatprep.subr.bf16.mxu0 0
    %399 = vmatpush1.bf16.msra.mxu0 0
    %400 = vmatprep.mubr.bf16.mxu0 0
    %401 = vmatmul.mubr.bf16.gmra.mrb[0].mxu0 %v175
    %v402 = vpop.f32.mrb[0].mxu0
    %v403 = vadd.f32 0.0, %v402
    %v404 = vpop.f32.mrb[0].mxu0
    %v405 = vadd.f32 0.0, %v404
    %v406 = vpop.f32.mrb[0].mxu0
    %v407 = vadd.f32 0.0, %v406
    %v408 = vpop.f32.mrb[0].mxu0
    %v409 = vadd.f32 0.0, %v408
    %410 = vdwg.mxu0
    %411 = vmatprep.subr.bf16.mxu0 %v307
    %412 = vmatpush1.bf16.msra.mxu0 %v306
    %413 = vmatprep.subr.bf16.mxu0 %v311
    %414 = vmatpush1.bf16.msra.mxu0 %v310
    %415 = vmatprep.subr.bf16.mxu0 %v315
    %416 = vmatpush1.bf16.msra.mxu0 %v314
    %417 = vmatprep.subr.bf16.mxu0 %v319
    %418 = vmatpush1.bf16.msra.mxu0 %v318
    %419 = vmatprep.subr.bf16.mxu0 %v323
    %420 = vmatpush1.bf16.msra.mxu0 %v322
    %421 = vmatprep.subr.bf16.mxu0 %v327
    %422 = vmatpush1.bf16.msra.mxu0 %v326
    %423 = vmatprep.subr.bf16.mxu0 %v331
    %424 = vmatpush1.bf16.msra.mxu0 %v330
    %425 = vmatprep.subr.bf16.mxu0 %v335
    %426 = vmatpush1.bf16.msra.mxu0 %v334
    %427 = vmatprep.subr.bf16.mxu0 0
    %428 = vmatpush1.bf16.msra.mxu0 0
    %429 = vmatprep.subr.bf16.mxu0 0
    %430 = vmatpush1.bf16.msra.mxu0 0
    %431 = vmatprep.subr.bf16.mxu0 0
    %432 = vmatpush1.bf16.msra.mxu0 0
    %433 = vmatprep.subr.bf16.mxu0 0
    %434 = vmatpush1.bf16.msra.mxu0 0
    %435 = vmatprep.subr.bf16.mxu0 0
    %436 = vmatpush1.bf16.msra.mxu0 0
    %437 = vmatprep.subr.bf16.mxu0 0
    %438 = vmatpush1.bf16.msra.mxu0 0
    %439 = vmatprep.subr.bf16.mxu0 0
    %440 = vmatpush1.bf16.msra.mxu0 0
    %441 = vmatprep.subr.bf16.mxu0 0
    %442 = vmatpush1.bf16.msra.mxu0 0
    %443 = vmatprep.mubr.bf16.mxu0 0
    %444 = vmatmul.mubr.bf16.gmra.mrb[0].mxu0 %v175
    %v445 = vpop.f32.mrb[0].mxu0
    %v446 = vadd.f32 0.0, %v445
    %v447 = vpop.f32.mrb[0].mxu0
    %v448 = vadd.f32 0.0, %v447
    %v449 = vpop.f32.mrb[0].mxu0
    %v450 = vadd.f32 0.0, %v449
    %v451 = vpop.f32.mrb[0].mxu0
    %v452 = vadd.f32 0.0, %v451
    %453 = vdwg.mxu0
    %v454 = vrcp.pop %v446
    %v455 = vrcp.pop %v448
    %v456 = vrcp.pop %v450
    %v457 = vrcp.pop %v452
    %v458 = vmul.f32 %v403, %v454
    %v459 = vmul.f32 %v405, %v455
    %v460 = vmul.f32 %v407, %v456
    %v461 = vmul.f32 %v409, %v457
    %v462 = vpack.c.bf16 %v460, %v458
    %v463 = vpack.c.bf16 %v461, %v459
    %v466 = vunpack.c.l.b16 %v462
    %v467 = vunpack.c.l.b16 %v463
    %v468 = vunpack.c.h.b16 %v462
    %v469 = vunpack.c.h.b16 %v463
    %v470 = vpack.c.b16 %v467, %v466
    %v471 = vpack.c.b16 %v469, %v468
    %474 = vst [vmem:[#allocation8] sm:$0xff] %v470
    %475 = vst [vmem:[#allocation8 + $0x8] sm:$0xff] %v471
    // Predicated region
    $region26: #{tpu_custom_call.1} parent=1 // pred_check
      _
    $region27: #{tpu_custom_call.1} parent=1 // pred_check_branch
      %477 = sbr.rel (0) target = $region29
    $region28: #{tpu_custom_call.1} parent=1 // pred_region
      %s479 = ssub.s32 256, 256
      %480 = vsyncadd [#allocation4], %s479
      %s481 = sshll.u32 [#allocation8], 4
      %s482 = int_to_ptr.vmem [resolvable:$true] %s481
      %487 = dma.vmem_to_hbm [thread:$0]  %s482, 256, %s3, [#allocation4], 128, 128, 8
    $region29: #{tpu_custom_call.1} parent=1 // pred_fallthru
      _
    // Predicated region
    $region30: #{tpu_custom_call.1} parent=1 // pred_check
      _
    $region31: #{tpu_custom_call.1} parent=1 // pred_check_branch
      %489 = sbr.rel (0) target = $region33
    $region32: #{tpu_custom_call.1} parent=1 // pred_region
      %490 = dma.done [#allocation4], 256
    $region33: #{tpu_custom_call.1} parent=1 // pred_fallthru
      _
    %491 = vsyncpa [#allocation3], 1
    %492 = vsyncpa [#allocation6], 1
    %493 = vsyncpa [#allocation4], 1

</llo_original>
